<compile_context>
chip_gen: v6e
topology: v6e:2x2x1
jax: 0.10.0
libtpu: 0.0.40
codegen_flags: <defaults>
</compile_context>

<pallas_src>
import jax
import jax.numpy as jnp
from jax import lax
from jax.experimental import pallas as pl
from jax.experimental.pallas import tpu as pltpu

H1, H2 = 64, 32  # hidden widths of the reference nn.Module


def _dnn_kernel(x_ref, w1_ref, b1_ref, w2_ref, b2_ref, w3_ref, b3_ref, o_ref):
    # fc1 + ReLU: MXU matmul with f32 accumulation; bias/ReLU in f32 on the VPU.
    # The cast is a free VPU op on the VMEM tile (no-op when dtypes already match).
    x = x_ref[...].astype(w1_ref.dtype)
    h1 = jnp.dot(x, w1_ref[...], preferred_element_type=jnp.float32) + b1_ref[...]
    h1 = jnp.maximum(h1, 0.0)

    # fc2 + ReLU.  (In the bf16 path h1 is quantized to bf16 here -- a deliberate
    # precision/accuracy trade on top of bf16 storage of the inputs.)
    h2 = jnp.dot(h1.astype(w2_ref.dtype), w2_ref[...],
                 preferred_element_type=jnp.float32) + b2_ref[...]
    h2 = jnp.maximum(h2, 0.0)

    # fc3 as (1, 32) @ h2^T -> (1, tile_b): a transposed-RHS matmul (q @ k.T
    # pattern).  This yields a lane-dense output row directly -- no sublane->lane
    # relayout, unmasked lane stores, contiguous writeback DMA.
    z = lax.dot_general(w3_ref[...], h2, (((1,), (1,)), ((), ())),
                        preferred_element_type=jnp.float32)
    z = z + b3_ref[0, 0]

    # Exact sigmoid: exp runs on the EUP slot, the divide is cheap and restores
    # near-exact parity with the PyTorch reference (approx reciprocal not needed).
    o_ref[...] = (1.0 / (1.0 + jnp.exp(-z))).astype(o_ref.dtype)


def _pick_tile_b(B, F, x_itemsize, tile_b):
    """Batch-tile selection (multiple of 128).

    Budget: double-buffered x tile + f32 h1/h2 activations kept under ~12 MiB so
    the kernel fits every generation's *default* scoped VMEM limit (v5e 16 MiB,
    v7x 64 MiB physical / 32 MiB scoped) without a vmem_limit_bytes override.
    # TODO(synk): for very large input_size, raise vmem_limit_bytes (<= ~48 MiB on
    # v7x) instead of shrinking tile_b below ~1024 rows.
    """
    tile_b = max(128, (int(tile_b) // 128) * 128)
    per_row = 2 * F * x_itemsize + 2 * (H1 + H2) * 4 + 64  # x dbl-buffer + h1/h2 + slack
    budget = 12 * 1024 * 1024
    max_rows = max(128, (budget // per_row) // 128 * 128)
    tile_b = min(tile_b, max_rows)
    if B >= 256:
        # Keep >=2 grid steps so ("parallel",) can shard the grid over v7x's 2 TCs.
        tile_b = min(tile_b, max(128, (B // 2) // 128 * 128))
    # Never exceed the 128-rounded batch.
    tile_b = min(tile_b, ((B + 127) // 128) * 128)
    return tile_b


def dnn_forward(x, params, *, tile_b=2048, weight_dtype=None):
    """Fused MLP forward.

    x: (B, input_size), float32 or bfloat16.  Returns (B, 1) float32 sigmoid outputs.
    tile_b: batch rows per grid step (rounded/clamped to a multiple of 128).
    weight_dtype: e.g. jnp.bfloat16 to store w1/w2 narrow (halves their HBM read on
        all generations -- v5e's MXU is bf16-native too).  x is *not* cast here (a
        wrapper-side astype would cost an extra HBM pass); store/pass x in bf16
        upstream to halve the dominant x read.
    # TODO(synk): optional fp8 (v7x MXU) / int8 (v6e MXU) storage paths for x/w1
    # with per-tensor scales would further cut the dominant HBM read.
    """
    w1, b1, w2, b2, w3, b3 = (
        params["w1"], params["b1"], params["w2"],
        params["b2"], params["w3"], params["b3"],
    )
    B, F = x.shape

    if weight_dtype is not None:
        # Tiny one-time casts of the resident weights only.
        w1 = w1.astype(weight_dtype)
        w2 = w2.astype(weight_dtype)
    b1 = b1.reshape(1, H1).astype(jnp.float32)
    b2 = b2.reshape(1, H2).astype(jnp.float32)
    w3_row = w3.reshape(1, H2).astype(jnp.float32)   # (32,1) -> (1,32) row for fc3
    b3 = b3.reshape(1, 1).astype(jnp.float32)

    tile_b = _pick_tile_b(B, F, jnp.dtype(x.dtype).itemsize, tile_b)
    num_steps = pl.cdiv(B, tile_b)
    b_pad = num_steps * tile_b

    resident = lambda i: (0, 0)  # weights/biases: same block every grid step
    out = pl.pallas_call(
        _dnn_kernel,
        out_shape=jax.ShapeDtypeStruct((1, b_pad), jnp.float32),
        grid=(num_steps,),
        in_specs=[
            # x tile: auto double-buffered HBM->VMEM DMA overlapped with compute.
            # (If profiling ever shows exposed DMA, sweep pipeline_mode=pl.Buffered(3).)
            pl.BlockSpec((tile_b, F), lambda i: (i, 0)),
            pl.BlockSpec((F, H1), resident),                    # w1 (VMEM-resident)
            pl.BlockSpec((1, H1), resident),                    # b1
            pl.BlockSpec((H1, H2), resident),                   # w2
            pl.BlockSpec((1, H2), resident),                    # b2
            pl.BlockSpec((1, H2), resident),                    # w3 row
            pl.BlockSpec((1, 1), resident,
                         memory_space=pltpu.MemorySpace.SMEM),  # b3 scalar
        ],
        # Lane-dense output row per step -> unmasked stores, contiguous writeback.
        out_specs=pl.BlockSpec((1, tile_b), lambda i: (0, i)),
        compiler_params=pltpu.CompilerParams(
            dimension_semantics=("parallel",)),  # v7x: shard grid over both TCs
    )(x, w1, b1, w2, b2, w3_row, b3)

    # (1, b_pad) -> (B, 1): free row-major reshape, then drop the padded tail
    # (those rows were computed from masked/garbage reads and are never used).
    return out.reshape(b_pad, 1)[:B]


def init_params(key, input_size):
    """PyTorch-default-like Linear init: U[-1/sqrt(fan_in), 1/sqrt(fan_in)]."""
    ks = jax.random.split(key, 6)

    def lin(kw, kb, fan_in, fan_out):
        bound = 1.0 / jnp.sqrt(fan_in)
        w = jax.random.uniform(kw, (fan_in, fan_out), jnp.float32, -bound, bound)
        b = jax.random.uniform(kb, (1, fan_out), jnp.float32, -bound, bound)
        return w, b

    w1, b1 = lin(ks[0], ks[1], input_size, H1)
    w2, b2 = lin(ks[2], ks[3], H1, H2)
    w3, b3 = lin(ks[4], ks[5], H2, 1)
    return {"w1": w1, "b1": b1, "w2": w2, "b2": b2, "w3": w3, "b3": b3}


def dnn_reference(x, p):
    """Plain-JAX reference of the same forward pass."""
    h = jnp.maximum(x @ p["w1"] + p["b1"], 0.0)
    h = jnp.maximum(h @ p["w2"] + p["b2"], 0.0)
    return jax.nn.sigmoid(h @ p["w3"] + p["b3"])


if __name__ == "__main__":
    key = jax.random.PRNGKey(0)
    k_x, k_p = jax.random.split(key)

    batch, input_size = 8, 32
    x = jax.random.normal(k_x, (batch, input_size), jnp.float32)
    params = init_params(k_p, input_size)
    ref = dnn_reference(x, params)

    # f32 path.
    out = jax.block_until_ready(dnn_forward(x, params))
    assert out.shape == (batch, 1)
    assert jnp.allclose(out, ref, atol=1e-2, rtol=1e-2), \
        float(jnp.max(jnp.abs(out - ref)))

    # Ragged batch: multi-step pipelined grid + Pallas-masked partial last block
    # (no wrapper-side jnp.pad of x).
    x_big = jax.random.normal(k_x, (300, input_size), jnp.float32)
    out_big = jax.block_until_ready(dnn_forward(x_big, params, tile_b=128))
    ref_big = dnn_reference(x_big, params)
    assert out_big.shape == (300, 1)
    assert jnp.allclose(out_big, ref_big, atol=1e-2, rtol=1e-2), \
        float(jnp.max(jnp.abs(out_big - ref_big)))

    # bf16 storage path: weights cast once in the wrapper; x supplied in bf16 by
    # the caller (simulating upstream bf16 storage -> no extra HBM pass here).
    out_bf16 = jax.block_until_ready(
        dnn_forward(x.astype(jnp.bfloat16), params, weight_dtype=jnp.bfloat16))
    assert out_bf16.shape == (batch, 1)
    assert jnp.allclose(out_bf16, ref, atol=5e-2, rtol=5e-2), \
        float(jnp.max(jnp.abs(out_bf16 - ref)))

    print("KERNEL_OK")
</pallas_src>

<mosaic_0001>
module attributes {stable_mosaic.version = 11 : i64} {
  func.func @_dnn_kernel(%arg0: i32, %arg1: memref<128x32xf32, #tpu.memory_space<vmem>>, %arg2: memref<32x64xf32, #tpu.memory_space<vmem>>, %arg3: memref<1x64xf32, #tpu.memory_space<vmem>>, %arg4: memref<64x32xf32, #tpu.memory_space<vmem>>, %arg5: memref<1x32xf32, #tpu.memory_space<vmem>>, %arg6: memref<1x32xf32, #tpu.memory_space<vmem>>, %arg7: memref<1x1xf32, #tpu.memory_space<smem>>, %arg8: memref<1x128xf32, #tpu.memory_space<vmem>>) attributes {dimension_semantics = [#tpu.dimension_semantics<parallel>], iteration_bounds = array<i64: 1>, scalar_prefetch = 0 : i64, scratch_operands = 0 : i64, tpu.core_type = #tpu.core_type<tc>, window_params = [{transform_indices = @transform_0, window_bounds = array<i64: 128, 32>}, {pipeline_mode = #tpu.pipeline_mode<synchronous>, transform_indices = @transform_1, window_bounds = array<i64: 32, 64>}, {pipeline_mode = #tpu.pipeline_mode<synchronous>, transform_indices = @transform_2, window_bounds = array<i64: 1, 64>}, {pipeline_mode = #tpu.pipeline_mode<synchronous>, transform_indices = @transform_3, window_bounds = array<i64: 64, 32>}, {pipeline_mode = #tpu.pipeline_mode<synchronous>, transform_indices = @transform_4, window_bounds = array<i64: 1, 32>}, {pipeline_mode = #tpu.pipeline_mode<synchronous>, transform_indices = @transform_5, window_bounds = array<i64: 1, 32>}, {transform_indices = @transform_6, window_bounds = array<i64: 1, 1>}, {transform_indices = @transform_7, window_bounds = array<i64: 1, 128>}]} {
    %c0 = arith.constant 0 : index
    %c0_0 = arith.constant 0 : index
    %0 = vector.load %arg1[%c0, %c0_0] : memref<128x32xf32, #tpu.memory_space<vmem>>, vector<128x32xf32>
    %c0_1 = arith.constant 0 : index
    %c0_2 = arith.constant 0 : index
    %1 = vector.load %arg2[%c0_1, %c0_2] : memref<32x64xf32, #tpu.memory_space<vmem>>, vector<32x64xf32>
    %cst = arith.constant dense<0.000000e+00> : vector<128x64xf32>
    %2 = tpu.matmul %0, %1, %cst {dimension_numbers = #tpu.dot_dimension_numbers<[1], [0], [0], [1], [0, 0, 1, 1], [], []>} : vector<128x32xf32>, vector<32x64xf32>, vector<128x64xf32> -> vector<128x64xf32>
    %c0_3 = arith.constant 0 : index
    %c0_4 = arith.constant 0 : index
    %3 = vector.load %arg3[%c0_3, %c0_4] : memref<1x64xf32, #tpu.memory_space<vmem>>, vector<1x64xf32>
    %4 = vector.broadcast %3 : vector<1x64xf32> to vector<128x64xf32>
    %5 = arith.addf %2, %4 : vector<128x64xf32>
    %cst_5 = arith.constant 0.000000e+00 : f32
    %6 = vector.broadcast %cst_5 : f32 to vector<128x64xf32>
    %7 = arith.maximumf %5, %6 : vector<128x64xf32>
    %c0_6 = arith.constant 0 : index
    %c0_7 = arith.constant 0 : index
    %8 = vector.load %arg4[%c0_6, %c0_7] : memref<64x32xf32, #tpu.memory_space<vmem>>, vector<64x32xf32>
    %cst_8 = arith.constant dense<0.000000e+00> : vector<128x32xf32>
    %9 = tpu.matmul %7, %8, %cst_8 {dimension_numbers = #tpu.dot_dimension_numbers<[1], [0], [0], [1], [0, 0, 1, 1], [], []>} : vector<128x64xf32>, vector<64x32xf32>, vector<128x32xf32> -> vector<128x32xf32>
    %c0_9 = arith.constant 0 : index
    %c0_10 = arith.constant 0 : index
    %10 = vector.load %arg5[%c0_9, %c0_10] : memref<1x32xf32, #tpu.memory_space<vmem>>, vector<1x32xf32>
    %11 = vector.broadcast %10 : vector<1x32xf32> to vector<128x32xf32>
    %12 = arith.addf %9, %11 : vector<128x32xf32>
    %cst_11 = arith.constant 0.000000e+00 : f32
    %13 = vector.broadcast %cst_11 : f32 to vector<128x32xf32>
    %14 = arith.maximumf %12, %13 : vector<128x32xf32>
    %c0_12 = arith.constant 0 : index
    %c0_13 = arith.constant 0 : index
    %15 = vector.load %arg6[%c0_12, %c0_13] : memref<1x32xf32, #tpu.memory_space<vmem>>, vector<1x32xf32>
    %cst_14 = arith.constant dense<0.000000e+00> : vector<1x128xf32>
    %16 = tpu.matmul %15, %14, %cst_14 {dimension_numbers = #tpu.dot_dimension_numbers<[1], [1], [0], [0], [0, 0, 1, 0], [], []>} : vector<1x32xf32>, vector<128x32xf32>, vector<1x128xf32> -> vector<1x128xf32>
    %c0_15 = arith.constant 0 : index
    %c0_16 = arith.constant 0 : index
    %17 = memref.load %arg7[%c0_15, %c0_16] : memref<1x1xf32, #tpu.memory_space<smem>>
    %18 = vector.broadcast %17 : f32 to vector<1x128xf32>
    %19 = arith.addf %16, %18 : vector<1x128xf32>
    %cst_17 = arith.constant 0.000000e+00 : f32
    %20 = vector.broadcast %cst_17 : f32 to vector<1x128xf32>
    %21 = arith.subf %20, %19 : vector<1x128xf32>
    %22 = math.exp %21 : vector<1x128xf32>
    %cst_18 = arith.constant 1.000000e+00 : f32
    %23 = vector.broadcast %cst_18 : f32 to vector<1x128xf32>
    %24 = arith.addf %23, %22 : vector<1x128xf32>
    %cst_19 = arith.constant 1.000000e+00 : f32
    %25 = vector.broadcast %cst_19 : f32 to vector<1x128xf32>
    %26 = arith.divf %25, %24 : vector<1x128xf32>
    %c0_20 = arith.constant 0 : index
    %c0_21 = arith.constant 0 : index
    %27 = vector.load %arg8[%c0_20, %c0_21] : memref<1x128xf32, #tpu.memory_space<vmem>>, vector<1x128xf32>
    tpu.vector_store %arg8[%c0_20, %c0_21], %26 {strides = array<i32>} : memref<1x128xf32, #tpu.memory_space<vmem>>, vector<1x128xf32>,
    return
  }
  func.func @transform_0(%arg0: i32) -> (i32, i32) {
    %c0_i32 = arith.constant 0 : i32
    %c0_i32_0 = arith.constant 0 : i32
    return %arg0, %c0_i32 : i32, i32
  }
  func.func @transform_1(%arg0: i32) -> (i32, i32) {
    %c0_i32 = arith.constant 0 : i32
    %c0_i32_0 = arith.constant 0 : i32
    %c0_i32_1 = arith.constant 0 : i32
    return %c0_i32, %c0_i32_0 : i32, i32
  }
  func.func @transform_2(%arg0: i32) -> (i32, i32) {
    %c0_i32 = arith.constant 0 : i32
    %c0_i32_0 = arith.constant 0 : i32
    %c0_i32_1 = arith.constant 0 : i32
    return %c0_i32, %c0_i32_0 : i32, i32
  }
  func.func @transform_3(%arg0: i32) -> (i32, i32) {
    %c0_i32 = arith.constant 0 : i32
    %c0_i32_0 = arith.constant 0 : i32
    %c0_i32_1 = arith.constant 0 : i32
    return %c0_i32, %c0_i32_0 : i32, i32
  }
  func.func @transform_4(%arg0: i32) -> (i32, i32) {
    %c0_i32 = arith.constant 0 : i32
    %c0_i32_0 = arith.constant 0 : i32
    %c0_i32_1 = arith.constant 0 : i32
    return %c0_i32, %c0_i32_0 : i32, i32
  }
  func.func @transform_5(%arg0: i32) -> (i32, i32) {
    %c0_i32 = arith.constant 0 : i32
    %c0_i32_0 = arith.constant 0 : i32
    %c0_i32_1 = arith.constant 0 : i32
    return %c0_i32, %c0_i32_0 : i32, i32
  }
  func.func @transform_6(%arg0: i32) -> (i32, i32) {
    %c0_i32 = arith.constant 0 : i32
    %c0_i32_0 = arith.constant 0 : i32
    %c0_i32_1 = arith.constant 0 : i32
    return %c0_i32, %c0_i32_0 : i32, i32
  }
  func.func @transform_7(%arg0: i32) -> (i32, i32) {
    %c0_i32 = arith.constant 0 : i32
    %c0_i32_0 = arith.constant 0 : i32
    return %c0_i32, %arg0 : i32, i32
  }
}

</mosaic_0001>

<llo_original>
// kernel: tpu_custom_call.1
$region0: #{tpu_custom_call.1}
  #allocation0 [shape = 'u32[]', space=smem, size = 0x4, offset = 0x4, fixed_abs, tag = 'smem constant byte address 0x4 - core index']
  #allocation1 [shape = 'u32[144,128]{1,0:T(1,128)}', space=vmem, size = 0x12000, scoped, tag = 'internal scratch']
  #allocation2 [shape = 'f32[1,1]{1,0:T(1,128)S(6)}', space=smem, size = 0x200, scoped, tag = 'scoped memory for tpu_custom_call.1']
  %s0 = inlined_call_operand.vmem [shape: f32[8,32], index: 0, kind: input, shape index: {}]
  %s1 = inlined_call_operand.vmem [shape: f32[32,64], index: 1, kind: input, shape index: {}]
  %s2 = inlined_call_operand.vmem [shape: f32[1,64], index: 2, kind: input, shape index: {}]
  %s3 = inlined_call_operand.vmem [shape: f32[64,32], index: 3, kind: input, shape index: {}]
  %s4 = inlined_call_operand.vmem [shape: f32[1,32], index: 4, kind: input, shape index: {}]
  %s5 = inlined_call_operand.vmem [shape: f32[1,32], index: 5, kind: input, shape index: {}]
  %s6 = inlined_call_operand.<no memory space> [shape: f32[1,1], index: 6, kind: input, shape index: {}]
  %s7 = inlined_call_operand.hbm [shape: f32[1,128], index: 7, kind: output, shape index: {}]
  %s8 = sld [smem:[#allocation0]]
  $region38: #{tpu_custom_call.1} parent=0
    _
  %s10 = ssub.s32 1, %s8
  %s11 = scalar_select 0, %s10, %s8
  %12 = sst [smem:[#allocation2]] %s6
  $region1: #{tpu_custom_call.1} parent=0
    #allocation3 [shape = 'u8[512]{0}', space=vmem, size = 0x400, scoped, tag = 'output window, operand 0, single buffered']
    #allocation4 [shape = 's32[1]{0}', space=sflag, size = 0x4, scoped, tag = 'scoped memory for tpu_custom_call.1']
    %13 = vsyncpa [#allocation4], 0
    // Predicated region
    $region2: #{tpu_custom_call.1} parent=1 // pred_check
      _
    $region3: #{tpu_custom_call.1} parent=1 // pred_check_branch
      %15 = sbr.rel (0) target = $region5
    $region4: #{tpu_custom_call.1} parent=1 // pred_region
      _
    $region5: #{tpu_custom_call.1} parent=1 // pred_fallthru
      _
    // Predicated region
    $region6: #{tpu_custom_call.1} parent=1 // pred_check
      _
    $region7: #{tpu_custom_call.1} parent=1 // pred_check_branch
      %17 = sbr.rel (0) target = $region9
    $region8: #{tpu_custom_call.1} parent=1 // pred_region
      _
    $region9: #{tpu_custom_call.1} parent=1 // pred_fallthru
      _
    // Predicated region
    $region10: #{tpu_custom_call.1} parent=1 // pred_check
      _
    $region11: #{tpu_custom_call.1} parent=1 // pred_check_branch
      %19 = sbr.rel (0) target = $region13
    $region12: #{tpu_custom_call.1} parent=1 // pred_region
      _
    $region13: #{tpu_custom_call.1} parent=1 // pred_fallthru
      _
    // Predicated region
    $region14: #{tpu_custom_call.1} parent=1 // pred_check
      _
    $region15: #{tpu_custom_call.1} parent=1 // pred_check_branch
      %21 = sbr.rel (0) target = $region17
    $region16: #{tpu_custom_call.1} parent=1 // pred_region
      _
    $region17: #{tpu_custom_call.1} parent=1 // pred_fallthru
      _
    // Predicated region
    $region18: #{tpu_custom_call.1} parent=1 // pred_check
      _
    $region19: #{tpu_custom_call.1} parent=1 // pred_check_branch
      %23 = sbr.rel (0) target = $region21
    $region20: #{tpu_custom_call.1} parent=1 // pred_region
      _
    $region21: #{tpu_custom_call.1} parent=1 // pred_fallthru
      _
    // Predicated region
    $region22: #{tpu_custom_call.1} parent=1 // pred_check
      _
    $region23: #{tpu_custom_call.1} parent=1 // pred_check_branch
      %25 = sbr.rel (0) target = $region25
    $region24: #{tpu_custom_call.1} parent=1 // pred_region
      _
    $region25: #{tpu_custom_call.1} parent=1 // pred_fallthru
      _
    // Predicated region
    $region26: #{tpu_custom_call.1} parent=1 // pred_check
      _
    $region27: #{tpu_custom_call.1} parent=1 // pred_check_branch
      %27 = sbr.rel (0) target = $region29
    $region28: #{tpu_custom_call.1} parent=1 // pred_region
      _
    $region29: #{tpu_custom_call.1} parent=1 // pred_fallthru
      _
    %v28 = vld [vmem:[%s0] sm:$0xff]
    %v29 = vld [vmem:[%s0 + $0x8] sm:$0xff]
    %v30 = vld [vmem:[%s0 + $0x10] sm:$0xff]
    %v31 = vld [vmem:[%s0 + $0x18] sm:$0xff]
    %v32 = vld [vmem:[%s0 + $0x20] sm:$0xff]
    %v33 = vld [vmem:[%s0 + $0x28] sm:$0xff]
    %v34 = vld [vmem:[%s0 + $0x30] sm:$0xff]
    %v35 = vld [vmem:[%s0 + $0x38] sm:$0xff]
    %v36 = vld [vmem:[%s0 + $0x40] sm:$0xff]
    %v37 = vld [vmem:[%s0 + $0x48] sm:$0xff]
    %v38 = vld [vmem:[%s0 + $0x50] sm:$0xff]
    %v39 = vld [vmem:[%s0 + $0x58] sm:$0xff]
    %v40 = vld [vmem:[%s0 + $0x60] sm:$0xff]
    %v41 = vld [vmem:[%s0 + $0x68] sm:$0xff]
    %v42 = vld [vmem:[%s0 + $0x70] sm:$0xff]
    %v43 = vld [vmem:[%s0 + $0x78] sm:$0xff]
    %v44 = vld [vmem:[%s1] sm:$0xff]
    %v45 = vld [vmem:[%s1 + $0x8] sm:$0xff]
    %v46 = vld [vmem:[%s1 + $0x10] sm:$0xff]
    %v47 = vld [vmem:[%s1 + $0x18] sm:$0xff]
    %v48 = vld [vmem:[%s2] sm:$0x1]
    %v50 = vlaneseq
    %v51 = vshrl.u32 %v50, 7
    %v52 = vsub.s32 0, %v51
    %v53 = vrot.slane %v48, %v52
    %vm55 = vcmask 261120
    %v57 = vsel %vm55, %v28, 0
    %v60 = vsel %vm55, %v29, 0
    %v63 = vsel %vm55, %v30, 0
    %v66 = vsel %vm55, %v31, 0
    %v69 = vsel %vm55, %v32, 0
    %v72 = vsel %vm55, %v33, 0
    %v75 = vsel %vm55, %v34, 0
    %v78 = vsel %vm55, %v35, 0
    %v81 = vsel %vm55, %v36, 0
    %v84 = vsel %vm55, %v37, 0
    %v87 = vsel %vm55, %v38, 0
    %v90 = vsel %vm55, %v39, 0
    %v93 = vsel %vm55, %v40, 0
    %v96 = vsel %vm55, %v41, 0
    %v99 = vsel %vm55, %v42, 0
    %v102 = vsel %vm55, %v43, 0
    %104 = vmatprep.subr.mxu0 0.0
    %105 = vmatpush1.msra.mxu0 0.0
    %106 = vmatprep.subr.mxu0 0.0
    %107 = vmatpush1.msra.mxu0 0.0
    %108 = vmatprep.subr.mxu0 0.0
    %109 = vmatpush1.msra.mxu0 0.0
    %110 = vmatprep.subr.mxu0 0.0
    %111 = vmatpush1.msra.mxu0 0.0
    %112 = vmatprep.subr.mxu0 0.0
    %113 = vmatpush1.msra.mxu0 0.0
    %114 = vmatprep.subr.mxu0 0.0
    %115 = vmatpush1.msra.mxu0 0.0
    %116 = vmatprep.subr.mxu0 0.0
    %117 = vmatpush1.msra.mxu0 0.0
    %118 = vmatprep.subr.mxu0 0.0
    %119 = vmatpush1.msra.mxu0 0.0
    %120 = vmatprep.subr.mxu0 0.0
    %121 = vmatpush1.msra.mxu0 0.0
    %122 = vmatprep.subr.mxu0 0.0
    %123 = vmatpush1.msra.mxu0 0.0
    %124 = vmatprep.subr.mxu0 0.0
    %125 = vmatpush1.msra.mxu0 0.0
    %126 = vmatprep.subr.mxu0 0.0
    %127 = vmatpush1.msra.mxu0 0.0
    %128 = vmatprep.subr.mxu0 0.0
    %129 = vmatpush1.msra.mxu0 %v47
    %130 = vmatprep.subr.mxu0 0.0
    %131 = vmatpush1.msra.mxu0 %v46
    %132 = vmatprep.subr.mxu0 0.0
    %133 = vmatpush1.msra.mxu0 %v45
    %134 = vmatprep.subr.mxu0 0.0
    %135 = vmatpush1.msra.mxu0 %v44
    %136 = vmatprep.subr.mxu0 0.0
    %137 = vmatpush2.msra.mxu0 0.0
    %138 = vmatprep.subr.mxu0 0.0
    %139 = vmatpush2.msra.mxu0 0.0
    %140 = vmatprep.subr.mxu0 0.0
    %141 = vmatpush2.msra.mxu0 0.0
    %142 = vmatprep.subr.mxu0 0.0
    %143 = vmatpush2.msra.mxu0 0.0
    %144 = vmatprep.subr.mxu0 0.0
    %145 = vmatpush2.msra.mxu0 0.0
    %146 = vmatprep.subr.mxu0 0.0
    %147 = vmatpush2.msra.mxu0 0.0
    %148 = vmatprep.subr.mxu0 0.0
    %149 = vmatpush2.msra.mxu0 0.0
    %150 = vmatprep.subr.mxu0 0.0
    %151 = vmatpush2.msra.mxu0 0.0
    %152 = vmatprep.subr.mxu0 0.0
    %153 = vmatpush2.msra.mxu0 0.0
    %154 = vmatprep.subr.mxu0 0.0
    %155 = vmatpush2.msra.mxu0 0.0
    %156 = vmatprep.subr.mxu0 0.0
    %157 = vmatpush2.msra.mxu0 0.0
    %158 = vmatprep.subr.mxu0 0.0
    %159 = vmatpush2.msra.mxu0 0.0
    %160 = vmatprep.subr.mxu0 0.0
    %161 = vmatpush2.msra.mxu0 0.0
    %162 = vmatprep.subr.mxu0 0.0
    %163 = vmatpush2.msra.mxu0 0.0
    %164 = vmatprep.subr.mxu0 0.0
    %165 = vmatpush2.msra.mxu0 0.0
    %166 = vmatprep.subr.mxu0 0.0
    %167 = vmatpush2.msra.mxu0 0.0
    %168 = vmatprep.mubr.f32.mxu0 0.0
    %169 = vmatmul.mubr.f32.gmra.mxu0 %v57
    %v170 = vpop.f32.mrf.mxu0
    %v171 = vadd.f32 %v53, %v170
    %v172 = vpop.f32.mrf.mxu0
    %173 = vmatprep.mubr.f32.mxu0 0.0
    %174 = vmatmul.mubr.f32.gmra.mxu0 %v60
    %v175 = vpop.f32.mrf.mxu0
    %v176 = vadd.f32 %v53, %v175
    %v177 = vpop.f32.mrf.mxu0
    %178 = vmatprep.mubr.f32.mxu0 0.0
    %179 = vmatmul.mubr.f32.gmra.mxu0 %v63
    %v180 = vpop.f32.mrf.mxu0
    %v181 = vadd.f32 %v53, %v180
    %v182 = vpop.f32.mrf.mxu0
    %183 = vmatprep.mubr.f32.mxu0 0.0
    %184 = vmatmul.mubr.f32.gmra.mxu0 %v66
    %v185 = vpop.f32.mrf.mxu0
    %v186 = vadd.f32 %v53, %v185
    %v187 = vpop.f32.mrf.mxu0
    %188 = vmatprep.mubr.f32.mxu0 0.0
    %189 = vmatmul.mubr.f32.gmra.mxu0 %v69
    %v190 = vpop.f32.mrf.mxu0
    %v191 = vadd.f32 %v53, %v190
    %v192 = vpop.f32.mrf.mxu0
    %193 = vmatprep.mubr.f32.mxu0 0.0
    %194 = vmatmul.mubr.f32.gmra.mxu0 %v72
    %v195 = vpop.f32.mrf.mxu0
    %v196 = vadd.f32 %v53, %v195
    %v197 = vpop.f32.mrf.mxu0
    %198 = vmatprep.mubr.f32.mxu0 0.0
    %199 = vmatmul.mubr.f32.gmra.mxu0 %v75
    %v200 = vpop.f32.mrf.mxu0
    %v201 = vadd.f32 %v53, %v200
    %v202 = vpop.f32.mrf.mxu0
    %203 = vmatprep.mubr.f32.mxu0 0.0
    %204 = vmatmul.mubr.f32.gmra.mxu0 %v78
    %v205 = vpop.f32.mrf.mxu0
    %v206 = vadd.f32 %v53, %v205
    %v207 = vpop.f32.mrf.mxu0
    %208 = vmatprep.mubr.f32.mxu0 0.0
    %209 = vmatmul.mubr.f32.gmra.mxu0 %v81
    %v210 = vpop.f32.mrf.mxu0
    %v211 = vadd.f32 %v53, %v210
    %v212 = vpop.f32.mrf.mxu0
    %213 = vmatprep.mubr.f32.mxu0 0.0
    %214 = vmatmul.mubr.f32.gmra.mxu0 %v84
    %v215 = vpop.f32.mrf.mxu0
    %v216 = vadd.f32 %v53, %v215
    %v217 = vpop.f32.mrf.mxu0
    %218 = vmatprep.mubr.f32.mxu0 0.0
    %219 = vmatmul.mubr.f32.gmra.mxu0 %v87
    %v220 = vpop.f32.mrf.mxu0
    %v221 = vadd.f32 %v53, %v220
    %v222 = vpop.f32.mrf.mxu0
    %223 = vmatprep.mubr.f32.mxu0 0.0
    %224 = vmatmul.mubr.f32.gmra.mxu0 %v90
    %v225 = vpop.f32.mrf.mxu0
    %v226 = vadd.f32 %v53, %v225
    %v227 = vpop.f32.mrf.mxu0
    %228 = vmatprep.mubr.f32.mxu0 0.0
    %229 = vmatmul.mubr.f32.gmra.mxu0 %v93
    %v230 = vpop.f32.mrf.mxu0
    %v231 = vadd.f32 %v53, %v230
    %v232 = vpop.f32.mrf.mxu0
    %233 = vmatprep.mubr.f32.mxu0 0.0
    %234 = vmatmul.mubr.f32.gmra.mxu0 %v96
    %v235 = vpop.f32.mrf.mxu0
    %v236 = vadd.f32 %v53, %v235
    %v237 = vpop.f32.mrf.mxu0
    %238 = vmatprep.mubr.f32.mxu0 0.0
    %239 = vmatmul.mubr.f32.gmra.mxu0 %v99
    %v240 = vpop.f32.mrf.mxu0
    %v241 = vadd.f32 %v53, %v240
    %v242 = vpop.f32.mrf.mxu0
    %243 = vmatprep.mubr.f32.mxu0 0.0
    %244 = vmatmul.mubr.f32.gmra.mxu0 %v102
    %v245 = vpop.f32.mrf.mxu0
    %v246 = vadd.f32 %v53, %v245
    %v247 = vpop.f32.mrf.mxu0
    %248 = vdwg.mxu0
    %v249 = vmax.f32 %v171, 0.0
    %v250 = vmax.f32 %v176, 0.0
    %v251 = vmax.f32 %v181, 0.0
    %v252 = vmax.f32 %v186, 0.0
    %v253 = vmax.f32 %v191, 0.0
    %v254 = vmax.f32 %v196, 0.0
    %v255 = vmax.f32 %v201, 0.0
    %v256 = vmax.f32 %v206, 0.0
    %v257 = vmax.f32 %v211, 0.0
    %v258 = vmax.f32 %v216, 0.0
    %v259 = vmax.f32 %v221, 0.0
    %v260 = vmax.f32 %v226, 0.0
    %v261 = vmax.f32 %v231, 0.0
    %v262 = vmax.f32 %v236, 0.0
    %v263 = vmax.f32 %v241, 0.0
    %v264 = vmax.f32 %v246, 0.0
    %v265 = vld [vmem:[%s3] sm:$0xff]
    %v266 = vld [vmem:[%s3 + $0x8] sm:$0xff]
    %v267 = vld [vmem:[%s3 + $0x10] sm:$0xff]
    %v268 = vld [vmem:[%s3 + $0x18] sm:$0xff]
    %v269 = vld [vmem:[%s3 + $0x20] sm:$0xff]
    %v270 = vld [vmem:[%s3 + $0x28] sm:$0xff]
    %v271 = vld [vmem:[%s3 + $0x30] sm:$0xff]
    %v272 = vld [vmem:[%s3 + $0x38] sm:$0xff]
    %v273 = vld [vmem:[%s4] sm:$0x1]
    %v275 = vlaneseq
    %v276 = vshrl.u32 %v275, 7
    %v277 = vsub.s32 0, %v276
    %v278 = vrot.slane %v273, %v277
    %vm280 = vcmask 523264
    %v282 = vsel %vm280, %v249, 0
    %v285 = vsel %vm280, %v250, 0
    %v288 = vsel %vm280, %v251, 0
    %v291 = vsel %vm280, %v252, 0
    %v294 = vsel %vm280, %v253, 0
    %v297 = vsel %vm280, %v254, 0
    %v300 = vsel %vm280, %v255, 0
    %v303 = vsel %vm280, %v256, 0
    %v306 = vsel %vm280, %v257, 0
    %v309 = vsel %vm280, %v258, 0
    %v312 = vsel %vm280, %v259, 0
    %v315 = vsel %vm280, %v260, 0
    %v318 = vsel %vm280, %v261, 0
    %v321 = vsel %vm280, %v262, 0
    %v324 = vsel %vm280, %v263, 0
    %v327 = vsel %vm280, %v264, 0
    %329 = vmatprep.subr.mxu0 0.0
    %330 = vmatpush1.msra.mxu0 0.0
    %331 = vmatprep.subr.mxu0 0.0
    %332 = vmatpush1.msra.mxu0 0.0
    %333 = vmatprep.subr.mxu0 0.0
    %334 = vmatpush1.msra.mxu0 0.0
    %335 = vmatprep.subr.mxu0 0.0
    %336 = vmatpush1.msra.mxu0 0.0
    %337 = vmatprep.subr.mxu0 0.0
    %338 = vmatpush1.msra.mxu0 0.0
    %339 = vmatprep.subr.mxu0 0.0
    %340 = vmatpush1.msra.mxu0 0.0
    %341 = vmatprep.subr.mxu0 0.0
    %342 = vmatpush1.msra.mxu0 0.0
    %343 = vmatprep.subr.mxu0 0.0
    %344 = vmatpush1.msra.mxu0 0.0
    %345 = vmatprep.subr.mxu0 0.0
    %346 = vmatpush1.msra.mxu0 %v272
    %347 = vmatprep.subr.mxu0 0.0
    %348 = vmatpush1.msra.mxu0 %v271
    %349 = vmatprep.subr.mxu0 0.0
    %350 = vmatpush1.msra.mxu0 %v270
    %351 = vmatprep.subr.mxu0 0.0
    %352 = vmatpush1.msra.mxu0 %v269
    %353 = vmatprep.subr.mxu0 0.0
    %354 = vmatpush1.msra.mxu0 %v268
    %355 = vmatprep.subr.mxu0 0.0
    %356 = vmatpush1.msra.mxu0 %v267
    %357 = vmatprep.subr.mxu0 0.0
    %358 = vmatpush1.msra.mxu0 %v266
    %359 = vmatprep.subr.mxu0 0.0
    %360 = vmatpush1.msra.mxu0 %v265
    %361 = vmatprep.subr.mxu0 0.0
    %362 = vmatpush2.msra.mxu0 0.0
    %363 = vmatprep.subr.mxu0 0.0
    %364 = vmatpush2.msra.mxu0 0.0
    %365 = vmatprep.subr.mxu0 0.0
    %366 = vmatpush2.msra.mxu0 0.0
    %367 = vmatprep.subr.mxu0 0.0
    %368 = vmatpush2.msra.mxu0 0.0
    %369 = vmatprep.subr.mxu0 0.0
    %370 = vmatpush2.msra.mxu0 0.0
    %371 = vmatprep.subr.mxu0 0.0
    %372 = vmatpush2.msra.mxu0 0.0
    %373 = vmatprep.subr.mxu0 0.0
    %374 = vmatpush2.msra.mxu0 0.0
    %375 = vmatprep.subr.mxu0 0.0
    %376 = vmatpush2.msra.mxu0 0.0
    %377 = vmatprep.subr.mxu0 0.0
    %378 = vmatpush2.msra.mxu0 0.0
    %379 = vmatprep.subr.mxu0 0.0
    %380 = vmatpush2.msra.mxu0 0.0
    %381 = vmatprep.subr.mxu0 0.0
    %382 = vmatpush2.msra.mxu0 0.0
    %383 = vmatprep.subr.mxu0 0.0
    %384 = vmatpush2.msra.mxu0 0.0
    %385 = vmatprep.subr.mxu0 0.0
    %386 = vmatpush2.msra.mxu0 0.0
    %387 = vmatprep.subr.mxu0 0.0
    %388 = vmatpush2.msra.mxu0 0.0
    %389 = vmatprep.subr.mxu0 0.0
    %390 = vmatpush2.msra.mxu0 0.0
    %391 = vmatprep.subr.mxu0 0.0
    %392 = vmatpush2.msra.mxu0 0.0
    %393 = vmatprep.mubr.f32.mxu0 0.0
    %394 = vmatmul.mubr.f32.gmra.mxu0 %v282
    %v395 = vpop.f32.mrf.mxu0
    %v396 = vadd.f32 %v278, %v395
    %v397 = vpop.f32.mrf.mxu0
    %398 = vmatprep.mubr.f32.mxu0 0.0
    %399 = vmatmul.mubr.f32.gmra.mxu0 %v285
    %v400 = vpop.f32.mrf.mxu0
    %v401 = vadd.f32 %v278, %v400
    %v402 = vpop.f32.mrf.mxu0
    %403 = vmatprep.mubr.f32.mxu0 0.0
    %404 = vmatmul.mubr.f32.gmra.mxu0 %v288
    %v405 = vpop.f32.mrf.mxu0
    %v406 = vadd.f32 %v278, %v405
    %v407 = vpop.f32.mrf.mxu0
    %408 = vmatprep.mubr.f32.mxu0 0.0
    %409 = vmatmul.mubr.f32.gmra.mxu0 %v291
    %v410 = vpop.f32.mrf.mxu0
    %v411 = vadd.f32 %v278, %v410
    %v412 = vpop.f32.mrf.mxu0
    %413 = vmatprep.mubr.f32.mxu0 0.0
    %414 = vmatmul.mubr.f32.gmra.mxu0 %v294
    %v415 = vpop.f32.mrf.mxu0
    %v416 = vadd.f32 %v278, %v415
    %v417 = vpop.f32.mrf.mxu0
    %418 = vmatprep.mubr.f32.mxu0 0.0
    %419 = vmatmul.mubr.f32.gmra.mxu0 %v297
    %v420 = vpop.f32.mrf.mxu0
    %v421 = vadd.f32 %v278, %v420
    %v422 = vpop.f32.mrf.mxu0
    %423 = vmatprep.mubr.f32.mxu0 0.0
    %424 = vmatmul.mubr.f32.gmra.mxu0 %v300
    %v425 = vpop.f32.mrf.mxu0
    %v426 = vadd.f32 %v278, %v425
    %v427 = vpop.f32.mrf.mxu0
    %428 = vmatprep.mubr.f32.mxu0 0.0
    %429 = vmatmul.mubr.f32.gmra.mxu0 %v303
    %v430 = vpop.f32.mrf.mxu0
    %v431 = vadd.f32 %v278, %v430
    %v432 = vpop.f32.mrf.mxu0
    %433 = vmatprep.mubr.f32.mxu0 0.0
    %434 = vmatmul.mubr.f32.gmra.mxu0 %v306
    %v435 = vpop.f32.mrf.mxu0
    %v436 = vadd.f32 %v278, %v435
    %v437 = vpop.f32.mrf.mxu0
    %438 = vmatprep.mubr.f32.mxu0 0.0
    %439 = vmatmul.mubr.f32.gmra.mxu0 %v309
    %v440 = vpop.f32.mrf.mxu0
    %v441 = vadd.f32 %v278, %v440
    %v442 = vpop.f32.mrf.mxu0
    %443 = vmatprep.mubr.f32.mxu0 0.0
    %444 = vmatmul.mubr.f32.gmra.mxu0 %v312
    %v445 = vpop.f32.mrf.mxu0
    %v446 = vadd.f32 %v278, %v445
    %v447 = vpop.f32.mrf.mxu0
    %448 = vmatprep.mubr.f32.mxu0 0.0
    %449 = vmatmul.mubr.f32.gmra.mxu0 %v315
    %v450 = vpop.f32.mrf.mxu0
    %v451 = vadd.f32 %v278, %v450
    %v452 = vpop.f32.mrf.mxu0
    %453 = vmatprep.mubr.f32.mxu0 0.0
    %454 = vmatmul.mubr.f32.gmra.mxu0 %v318
    %v455 = vpop.f32.mrf.mxu0
    %v456 = vadd.f32 %v278, %v455
    %v457 = vpop.f32.mrf.mxu0
    %458 = vmatprep.mubr.f32.mxu0 0.0
    %459 = vmatmul.mubr.f32.gmra.mxu0 %v321
    %v460 = vpop.f32.mrf.mxu0
    %v461 = vadd.f32 %v278, %v460
    %v462 = vpop.f32.mrf.mxu0
    %463 = vmatprep.mubr.f32.mxu0 0.0
    %464 = vmatmul.mubr.f32.gmra.mxu0 %v324
    %v465 = vpop.f32.mrf.mxu0
    %v466 = vadd.f32 %v278, %v465
    %v467 = vpop.f32.mrf.mxu0
    %468 = vmatprep.mubr.f32.mxu0 0.0
    %469 = vmatmul.mubr.f32.gmra.mxu0 %v327
    %v470 = vpop.f32.mrf.mxu0
    %v471 = vadd.f32 %v278, %v470
    %v472 = vpop.f32.mrf.mxu0
    %473 = vdwg.mxu0
    %v474 = vmax.f32 %v396, 0.0
    %v475 = vmax.f32 %v401, 0.0
    %v476 = vmax.f32 %v406, 0.0
    %v477 = vmax.f32 %v411, 0.0
    %v478 = vmax.f32 %v416, 0.0
    %v479 = vmax.f32 %v421, 0.0
    %v480 = vmax.f32 %v426, 0.0
    %v481 = vmax.f32 %v431, 0.0
    %v482 = vmax.f32 %v436, 0.0
    %v483 = vmax.f32 %v441, 0.0
    %v484 = vmax.f32 %v446, 0.0
    %v485 = vmax.f32 %v451, 0.0
    %v486 = vmax.f32 %v456, 0.0
    %v487 = vmax.f32 %v461, 0.0
    %v488 = vmax.f32 %v466, 0.0
    %v489 = vmax.f32 %v471, 0.0
    %v490 = vld [vmem:[%s5] sm:$0x1]
    %s491 = sld [smem:[#allocation2]]
    %v492 = vstv %s491
    %v494 = vsel %vm55, %v490, 0
    %v497 = vsel %vm55, %v474, 0
    %v500 = vsel %vm55, %v475, 0
    %v503 = vsel %vm55, %v476, 0
    %v506 = vsel %vm55, %v477, 0
    %v509 = vsel %vm55, %v478, 0
    %v512 = vsel %vm55, %v479, 0
    %v515 = vsel %vm55, %v480, 0
    %v518 = vsel %vm55, %v481, 0
    %v521 = vsel %vm55, %v482, 0
    %v524 = vsel %vm55, %v483, 0
    %v527 = vsel %vm55, %v484, 0
    %v530 = vsel %vm55, %v485, 0
    %v533 = vsel %vm55, %v486, 0
    %v536 = vsel %vm55, %v487, 0
    %v539 = vsel %vm55, %v488, 0
    %v542 = vsel %vm55, %v489, 0
    %544 = vmatprep.subr.mxu0 0.0
    %545 = vmatpush1.xpose.msra.mxu0 %v542
    %546 = vmatprep.subr.mxu0 0.0
    %547 = vmatpush1.xpose.msra.mxu0 %v539
    %548 = vmatprep.subr.mxu0 0.0
    %549 = vmatpush1.xpose.msra.mxu0 %v536
    %550 = vmatprep.subr.mxu0 0.0
    %551 = vmatpush1.xpose.msra.mxu0 %v533
    %552 = vmatprep.subr.mxu0 0.0
    %553 = vmatpush1.xpose.msra.mxu0 %v530
    %554 = vmatprep.subr.mxu0 0.0
    %555 = vmatpush1.xpose.msra.mxu0 %v527
    %556 = vmatprep.subr.mxu0 0.0
    %557 = vmatpush1.xpose.msra.mxu0 %v524
    %558 = vmatprep.subr.mxu0 0.0
    %559 = vmatpush1.xpose.msra.mxu0 %v521
    %560 = vmatprep.subr.mxu0 0.0
    %561 = vmatpush1.xpose.msra.mxu0 %v518
    %562 = vmatprep.subr.mxu0 0.0
    %563 = vmatpush1.xpose.msra.mxu0 %v515
    %564 = vmatprep.subr.mxu0 0.0
    %565 = vmatpush1.xpose.msra.mxu0 %v512
    %566 = vmatprep.subr.mxu0 0.0
    %567 = vmatpush1.xpose.msra.mxu0 %v509
    %568 = vmatprep.subr.mxu0 0.0
    %569 = vmatpush1.xpose.msra.mxu0 %v506
    %570 = vmatprep.subr.mxu0 0.0
    %571 = vmatpush1.xpose.msra.mxu0 %v503
    %572 = vmatprep.subr.mxu0 0.0
    %573 = vmatpush1.xpose.msra.mxu0 %v500
    %574 = vmatprep.subr.mxu0 0.0
    %575 = vmatpush1.xpose.msra.mxu0 %v497
    %576 = vmatprep.subr.mxu0 0.0
    %577 = vmatpush2.xpose.msra.mxu0 0.0
    %578 = vmatprep.subr.mxu0 0.0
    %579 = vmatpush2.xpose.msra.mxu0 0.0
    %580 = vmatprep.subr.mxu0 0.0
    %581 = vmatpush2.xpose.msra.mxu0 0.0
    %582 = vmatprep.subr.mxu0 0.0
    %583 = vmatpush2.xpose.msra.mxu0 0.0
    %584 = vmatprep.subr.mxu0 0.0
    %585 = vmatpush2.xpose.msra.mxu0 0.0
    %586 = vmatprep.subr.mxu0 0.0
    %587 = vmatpush2.xpose.msra.mxu0 0.0
    %588 = vmatprep.subr.mxu0 0.0
    %589 = vmatpush2.xpose.msra.mxu0 0.0
    %590 = vmatprep.subr.mxu0 0.0
    %591 = vmatpush2.xpose.msra.mxu0 0.0
    %592 = vmatprep.subr.mxu0 0.0
    %593 = vmatpush2.xpose.msra.mxu0 0.0
    %594 = vmatprep.subr.mxu0 0.0
    %595 = vmatpush2.xpose.msra.mxu0 0.0
    %596 = vmatprep.subr.mxu0 0.0
    %597 = vmatpush2.xpose.msra.mxu0 0.0
    %598 = vmatprep.subr.mxu0 0.0
    %599 = vmatpush2.xpose.msra.mxu0 0.0
    %600 = vmatprep.subr.mxu0 0.0
    %601 = vmatpush2.xpose.msra.mxu0 0.0
    %602 = vmatprep.subr.mxu0 0.0
    %603 = vmatpush2.xpose.msra.mxu0 0.0
    %604 = vmatprep.subr.mxu0 0.0
    %605 = vmatpush2.xpose.msra.mxu0 0.0
    %606 = vmatprep.subr.mxu0 0.0
    %607 = vmatpush2.xpose.msra.mxu0 0.0
    %608 = vmatprep.mubr.f32.mxu0 0.0
    %609 = vmatmul.mubr.f32.gmra.mxu0 %v494
    %v610 = vpop.f32.mrf.mxu0
    %v611 = vadd.f32 %v492, %v610
    %v612 = vpop.f32.mrf.mxu0
    %613 = vdwg.mxu0
    %v614 = vsub.f32 0.0, %v611
    %v615 = vmul.f32 %v614, 1.442695
    %v616 = vpow.pop %v615
    %v617 = vadd.f32 %v616, 1.0
    %v618 = vrcp.pop %v617
    %v619 = vmul.f32 1.0, %v618
    %620 = vst [vmem:[#allocation3] sm:$0x1] %v619
    // Predicated region
    $region30: #{tpu_custom_call.1} parent=1 // pred_check
      _
    $region31: #{tpu_custom_call.1} parent=1 // pred_check_branch
      %622 = sbr.rel (0) target = $region33
    $region32: #{tpu_custom_call.1} parent=1 // pred_region
      %s624 = ssub.s32 16, 16
      %625 = vsyncadd [#allocation4], %s624
      %s627 = sshll.u32 [#allocation3], 4
      %s628 = int_to_ptr.vmem [resolvable:$true] %s627
      %630 = dma.vmem_to_hbm [thread:$0]  %s628, 16, %s7, [#allocation4]
    $region33: #{tpu_custom_call.1} parent=1 // pred_fallthru
      _
    // Predicated region
    $region34: #{tpu_custom_call.1} parent=1 // pred_check
      _
    $region35: #{tpu_custom_call.1} parent=1 // pred_check_branch
      %632 = sbr.rel (0) target = $region37
    $region36: #{tpu_custom_call.1} parent=1 // pred_region
      %633 = dma.done [#allocation4], 16
    $region37: #{tpu_custom_call.1} parent=1 // pred_fallthru
      _
    %634 = vsyncpa [#allocation4], 1

</llo_original>
